<compile_context>
chip_gen: v7x
topology: tpu7x:2x2x1
jax: 0.10.0
libtpu: 0.0.40
codegen_flags: <defaults>
</compile_context>

<pallas_src>
import functools

import jax
import jax.numpy as jnp
from jax.experimental import pallas as pl
from jax.experimental.pallas import tpu as pltpu


def _sq_err_kernel(*refs, affine):
    """Accumulate group-of-8-row sums of (pred[*std+mean] - label)**2 into out."""
    if affine:
        pred_ref, label_ref, mean_ref, std_ref, out_ref = refs
    else:
        pred_ref, label_ref, out_ref = refs

    i = pl.program_id(1)  # reduction ("arbitrary") axis

    @pl.when(i == 0)
    def _():
        out_ref[...] = jnp.zeros_like(out_ref)

    pred = pred_ref[...].astype(jnp.float32)
    label = label_ref[...].astype(jnp.float32)
    if affine:
        diff = (pred * std_ref[...].astype(jnp.float32)
                + mean_ref[...].astype(jnp.float32) - label)
    else:
        diff = pred - label
    sq = diff * diff

    tb, d = sq.shape
    if tb == 8:
        out_ref[...] += sq
    else:
        # (tile_b, D) -> (tile_b//8, 8, D), reduce leading axis: pure VPU adds,
        # no per-step cross-sublane XLU reduce.
        out_ref[...] += jnp.sum(sq.reshape(tb // 8, 8, d), axis=0)


def _tpu_hw():
    """Best-effort (vmem_bytes, num_tensorcores); conservative on failure."""
    vmem_bytes = 64 * 1024 * 1024  # smallest per-TC VMEM across v5e/v6e/v7x
    num_cores = 1
    try:
        info = pltpu.get_tpu_info()
        v = getattr(info, "vmem_capacity_bytes", 0)
        if v:
            vmem_bytes = int(v)
        for name in ("num_tensorcores", "tensorcore_count", "num_cores",
                     "core_count"):
            c = getattr(info, name, None)
            if c:
                num_cores = max(1, min(int(c), 2))
                break
    except Exception:
        pass
    return vmem_bytes, num_cores


def loss_label_mean_std_unnormalized(pred_pose, label_pose,
                                     pose_mean=None, pose_std=None, *,
                                     weight=1.0, tile_b=None,
                                     num_core_splits=None):
    """weight * mean((pred_pose [* pose_std + pose_mean] - label_pose)**2)."""
    B, D = pred_pose.shape
    assert label_pose.shape == (B, D)
    affine = (pose_mean is not None) or (pose_std is not None)
    if affine:
        if pose_mean is None:
            pose_mean = jnp.zeros((1, D), jnp.float32)
        if pose_std is None:
            pose_std = jnp.ones((1, D), jnp.float32)
        assert pose_mean.shape == (1, D) and pose_std.shape == (1, D)

    vmem_bytes, num_cores = _tpu_hw()
    small_vmem = vmem_bytes <= 64 * 1024 * 1024          # v7x-class VMEM
    block_bytes_cap = (4 if small_vmem else 8) * 1024 * 1024

    itemsize = jnp.dtype(pred_pose.dtype).itemsize
    sublane = max(8, 32 // itemsize)                     # 8 f32 / 16 bf16 / 32 i8

    # ---- tile selection: biggest byte-capped, sublane-aligned tile <= B. ----
    max_tile = (B // sublane) * sublane
    if max_tile == 0:
        tile_b = 0
    else:
        if tile_b is None:
            tile_b = block_bytes_cap // max(1, D * itemsize)
        tile_b = min(int(tile_b), max_tile)
        tile_b = max(sublane, (tile_b // sublane) * sublane)

    total = jnp.zeros((), jnp.float32)
    rows_in_kernel = 0

    if tile_b > 0:
        n_tiles = B // tile_b
        splits = num_cores if num_core_splits is None else int(num_core_splits)
        splits = max(1, min(splits, n_tiles))
        nbuf = 3 if (splits > 1 and small_vmem) else 2

        def _kernel_sum(splits, core_parallel, nbuf):
            steps = n_tiles // splits
            rows = splits * steps * tile_b

            def stream_spec():
                idx = lambda c, i: (c * steps + i, 0)
                if nbuf != 2:
                    return pl.BlockSpec((tile_b, D), idx,
                                        pipeline_mode=pl.Buffered(nbuf))
                return pl.BlockSpec((tile_b, D), idx)

            in_specs = [stream_spec(), stream_spec()]
            operands = [pred_pose, label_pose]
            if affine:
                in_specs += [pl.BlockSpec((1, D), lambda c, i: (0, 0)),   # mean
                             pl.BlockSpec((1, D), lambda c, i: (0, 0))]   # std
                operands += [pose_mean, pose_std]

            lead_sem = pltpu.CORE_PARALLEL if core_parallel else pltpu.ARBITRARY
            vmem_limit = 2 * nbuf * tile_b * D * itemsize + (8 << 20)
            vmem_limit = min(max(vmem_limit, 16 << 20), vmem_bytes * 3 // 4)

            partials = pl.pallas_call(
                functools.partial(_sq_err_kernel, affine=affine),
                out_shape=jax.ShapeDtypeStruct((splits * 8, D), jnp.float32),
                grid_spec=pltpu.PrefetchScalarGridSpec(
                    num_scalar_prefetch=0,
                    grid=(splits, steps),
                    in_specs=in_specs,
                    out_specs=pl.BlockSpec((8, D), lambda c, i: (c, 0)),
                ),
                compiler_params=pltpu.CompilerParams(
                    dimension_semantics=(lead_sem, pltpu.ARBITRARY),
                    vmem_limit_bytes=int(vmem_limit),
                ),
            )(*operands)
            return jnp.sum(partials), rows

        try:
            ksum, rows_in_kernel = _kernel_sum(splits, splits > 1, nbuf)
        except Exception:
            if splits > 1 or nbuf != 2:
                # Safe fallback: single split, default double-buffering.
                ksum, rows_in_kernel = _kernel_sum(1, False, 2)
            else:
                raise
        total = total + ksum

    # ---- ragged tail (< one tile per split): tiny plain-JAX expression. ----
    # TODO(synk): for B < one sublane tile the whole loss runs on this JAX path.
    if rows_in_kernel < B:
        pt = pred_pose[rows_in_kernel:].astype(jnp.float32)
        lt = label_pose[rows_in_kernel:].astype(jnp.float32)
        if affine:
            dt = (pt * pose_std.astype(jnp.float32)
                  + pose_mean.astype(jnp.float32) - lt)
        else:
            dt = pt - lt
        total = total + jnp.sum(dt * dt)

    return total * (weight / float(B * D))


def mse_loss(pred, label, *, weight=1.0, tile_b=None):
    """Plain mean-reduced elementwise MSE (default inner loss for LossOnDict)."""
    return loss_label_mean_std_unnormalized(pred, label, None, None,
                                            weight=weight, tile_b=tile_b)


class LossOnDict:
    """JAX/Pallas port of the PyTorch LossOnDict module."""

    def __init__(self, key, loss):
        self.key = key
        self.loss = loss

    def __call__(self, pred_dict, label_dict):
        return self.loss(pred_dict[self.key], label_dict[self.key])


if __name__ == "__main__":
    key = jax.random.PRNGKey(0)
    k1, k2, k3, k4, k5, k6, k7, k8 = jax.random.split(key, 8)

    # Case 1: LossOnDict with the Pallas MSE inner loss on small dict tensors.
    B, D = 16, 128
    pred_dict = {"pose": jax.random.normal(k1, (B, D), dtype=jnp.float32)}
    label_dict = {"pose": jax.random.normal(k2, (B, D), dtype=jnp.float32)}
    loss_mod = LossOnDict("pose", mse_loss)
    out1 = jax.block_until_ready(loss_mod(pred_dict, label_dict))
    ref1 = jnp.mean((pred_dict["pose"] - label_dict["pose"]) ** 2)
    assert jnp.allclose(out1, ref1, rtol=1e-5, atol=1e-5), (out1, ref1)

    # Case 2: un-normalized weighted variant; ragged batch exercises the
    # tile-aligned-prefix + plain-JAX-tail path (no padding, no in-kernel mask).
    B2, D2 = 1000, 128
    weight = 2.0
    pred = jax.random.normal(k3, (B2, D2), dtype=jnp.float32)
    label = jax.random.normal(k4, (B2, D2), dtype=jnp.float32)
    pose_mean = jax.random.normal(k5, (1, D2), dtype=jnp.float32)
    pose_std = jax.random.uniform(k6, (1, D2), dtype=jnp.float32,
                                  minval=0.5, maxval=1.5)
    out2 = jax.block_until_ready(
        loss_label_mean_std_unnormalized(pred, label, pose_mean, pose_std,
                                         weight=weight, tile_b=64))
    ref2 = weight * jnp.mean((pred * pose_std + pose_mean - label) ** 2)
    assert jnp.allclose(out2, ref2, rtol=1e-4, atol=1e-5), (out2, ref2)

    # Case 3: bf16 inputs (dtype-aware sublane rounding + in-kernel f32 upcast).
    B3, D3 = 64, 256
    pred_b = jax.random.normal(k7, (B3, D3), dtype=jnp.bfloat16)
    label_b = jax.random.normal(k8, (B3, D3), dtype=jnp.bfloat16)
    out3 = jax.block_until_ready(mse_loss(pred_b, label_b))
    ref3 = jnp.mean((pred_b.astype(jnp.float32) - label_b.astype(jnp.float32)) ** 2)
    assert jnp.allclose(out3, ref3, rtol=1e-4, atol=1e-5), (out3, ref3)

    print("KERNEL_OK")
</pallas_src>

<mosaic_0001>
module attributes {stable_mosaic.version = 11 : i64} {
  func.func @_sq_err_kernel(%arg0: i32, %arg1: i32, %arg2: memref<16x128xf32, #tpu.memory_space<vmem>>, %arg3: memref<16x128xf32, #tpu.memory_space<vmem>>, %arg4: memref<8x128xf32, #tpu.memory_space<vmem>>) attributes {dimension_semantics = [#tpu.dimension_semantics<arbitrary>, #tpu.dimension_semantics<arbitrary>], iteration_bounds = array<i64: 1, 1>, scalar_prefetch = 0 : i64, scratch_operands = 0 : i64, tpu.core_type = #tpu.core_type<tc>, window_params = [{transform_indices = @transform_0, window_bounds = array<i64: 16, 128>}, {transform_indices = @transform_1, window_bounds = array<i64: 16, 128>}, {transform_indices = @transform_2, window_bounds = array<i64: 8, 128>}]} {
    %c0_i32 = arith.constant 0 : i32
    %0 = arith.cmpi eq, %arg1, %c0_i32 : i32
    %1 = arith.extui %0 : i1 to i32
    %c0_i32_0 = arith.constant 0 : i32
    %2 = arith.cmpi ne, %1, %c0_i32_0 : i32
    scf.if %2 {
      %cst_8 = arith.constant 0.000000e+00 : f32
      %12 = vector.broadcast %cst_8 : f32 to vector<8x128xf32>
      %c0_9 = arith.constant 0 : index
      %c0_10 = arith.constant 0 : index
      %13 = vector.load %arg4[%c0_9, %c0_10] : memref<8x128xf32, #tpu.memory_space<vmem>>, vector<8x128xf32>
      tpu.vector_store %arg4[%c0_9, %c0_10], %12 {strides = array<i32>} : memref<8x128xf32, #tpu.memory_space<vmem>>, vector<8x128xf32>,
    } else {
    }
    %c0 = arith.constant 0 : index
    %c0_1 = arith.constant 0 : index
    %3 = vector.load %arg2[%c0, %c0_1] : memref<16x128xf32, #tpu.memory_space<vmem>>, vector<16x128xf32>
    %c0_2 = arith.constant 0 : index
    %c0_3 = arith.constant 0 : index
    %4 = vector.load %arg3[%c0_2, %c0_3] : memref<16x128xf32, #tpu.memory_space<vmem>>, vector<16x128xf32>
    %5 = arith.subf %3, %4 : vector<16x128xf32>
    %6 = arith.mulf %5, %5 : vector<16x128xf32>
    %c0_4 = arith.constant 0 : index
    %c0_5 = arith.constant 0 : index
    %7 = vector.load %arg4[%c0_4, %c0_5] : memref<8x128xf32, #tpu.memory_space<vmem>>, vector<8x128xf32>
    %8 = vector.shape_cast %6 : vector<16x128xf32> to vector<2x8x128xf32>
    %cst = arith.constant dense<0.000000e+00> : vector<8x128xf32>
    %9 = vector.multi_reduction <add>, %8, %cst [0] : vector<2x8x128xf32> to vector<8x128xf32>
    %10 = arith.addf %7, %9 : vector<8x128xf32>
    %c0_6 = arith.constant 0 : index
    %c0_7 = arith.constant 0 : index
    %11 = vector.load %arg4[%c0_6, %c0_7] : memref<8x128xf32, #tpu.memory_space<vmem>>, vector<8x128xf32>
    tpu.vector_store %arg4[%c0_6, %c0_7], %10 {strides = array<i32>} : memref<8x128xf32, #tpu.memory_space<vmem>>, vector<8x128xf32>,
    return
  }
  func.func @transform_0(%arg0: i32, %arg1: i32) -> (i32, i32) {
    %c1_i32 = arith.constant 1 : i32
    %0 = arith.muli %arg0, %c1_i32 : i32
    %1 = arith.addi %0, %arg1 : i32
    %c0_i32 = arith.constant 0 : i32
    %c0_i32_0 = arith.constant 0 : i32
    return %1, %c0_i32 : i32, i32
  }
  func.func @transform_1(%arg0: i32, %arg1: i32) -> (i32, i32) {
    %c1_i32 = arith.constant 1 : i32
    %0 = arith.muli %arg0, %c1_i32 : i32
    %1 = arith.addi %0, %arg1 : i32
    %c0_i32 = arith.constant 0 : i32
    %c0_i32_0 = arith.constant 0 : i32
    return %1, %c0_i32 : i32, i32
  }
  func.func @transform_2(%arg0: i32, %arg1: i32) -> (i32, i32) {
    %c0_i32 = arith.constant 0 : i32
    %c0_i32_0 = arith.constant 0 : i32
    return %arg0, %c0_i32 : i32, i32
  }
}

</mosaic_0001>

<llo_original>
// kernel: tpu_custom_call.1
$region0: #{tpu_custom_call.1}
  #allocation0 [shape = 'u32[]', space=smem, size = 0x4, offset = 0x4, fixed_abs, tag = 'smem constant byte address 0x4 - core index']
  #allocation1 [shape = 'u32[144,128]{1,0:T(1,128)}', space=vmem, size = 0x12000, scoped, tag = 'internal scratch']
  %s0 = inlined_call_operand.hbm [shape: f32[16,128], index: 0, kind: input, shape index: {}]
  %s1 = inlined_call_operand.hbm [shape: f32[16,128], index: 1, kind: input, shape index: {}]
  %s2 = inlined_call_operand.hbm [shape: f32[8,128], index: 2, kind: output, shape index: {}]
  %s3 = sld [smem:[#allocation0]]
  $region30: #{tpu_custom_call.1} parent=0
    _
  %s5 = ssub.s32 1, %s3
  %s6 = scalar_select 0, %s5, %s3
  $region1: #{tpu_custom_call.1} parent=0
    #allocation2 [shape = 'u8[8192]{0}', space=vmem, size = 0x2000, scoped, tag = 'input window, operand 0, single buffered']
    #allocation3 [shape = 's32[1]{0}', space=sflag, size = 0x4, scoped, tag = 'scoped memory for tpu_custom_call.1']
    #allocation4 [shape = 's32[1]{0}', space=sflag, size = 0x4, scoped, tag = 'scoped memory for tpu_custom_call.1']
    #allocation5 [shape = 'u8[8192]{0}', space=vmem, size = 0x2000, scoped, tag = 'input window, operand 1, single buffered']
    #allocation6 [shape = 's32[1]{0}', space=sflag, size = 0x4, scoped, tag = 'scoped memory for tpu_custom_call.1']
    #allocation7 [shape = 'u8[4096]{0}', space=vmem, size = 0x1000, scoped, tag = 'output window, operand 0, single buffered']
    %7 = vsyncpa [#allocation3], 0
    %8 = vsyncpa [#allocation6], 0
    %9 = vsyncpa [#allocation4], 0
    // Predicated region
    $region2: #{tpu_custom_call.1} parent=1 // pred_check
      _
    $region3: #{tpu_custom_call.1} parent=1 // pred_check_branch
      %11 = sbr.rel (0) target = $region5
    $region4: #{tpu_custom_call.1} parent=1 // pred_region
      %s12 = sadd.s32 0, 0
      %s13 = smul.u32 2, %s12
      %s15 = ssub.s32 256, 256
      %16 = vsyncadd [#allocation3], %s15
      %s17 = smul.addr %s13, 128
      %s18 = scalar_lea.hbm %s0, %s17
      %s19 = sshll.u32 [#allocation2], 4
      %s20 = int_to_ptr.vmem [resolvable:$true] %s19
      %25 = dma.hbm_to_vmem [thread:$0]  %s18, 256, %s20, [#allocation3], 128, 128, 8
    $region5: #{tpu_custom_call.1} parent=1 // pred_fallthru
      _
    // Predicated region
    $region6: #{tpu_custom_call.1} parent=1 // pred_check
      _
    $region7: #{tpu_custom_call.1} parent=1 // pred_check_branch
      %27 = sbr.rel (0) target = $region9
    $region8: #{tpu_custom_call.1} parent=1 // pred_region
      %s28 = sadd.s32 0, 0
      %s29 = smul.u32 2, %s28
      %s31 = ssub.s32 256, 256
      %32 = vsyncadd [#allocation6], %s31
      %s33 = smul.addr %s29, 128
      %s34 = scalar_lea.hbm %s1, %s33
      %s35 = sshll.u32 [#allocation5], 4
      %s36 = int_to_ptr.vmem [resolvable:$true] %s35
      %41 = dma.hbm_to_vmem [thread:$0]  %s34, 256, %s36, [#allocation6], 128, 128, 8
    $region9: #{tpu_custom_call.1} parent=1 // pred_fallthru
      _
    // Predicated region
    $region10: #{tpu_custom_call.1} parent=1 // pred_check
      _
    $region11: #{tpu_custom_call.1} parent=1 // pred_check_branch
      %43 = sbr.rel (0) target = $region13
    $region12: #{tpu_custom_call.1} parent=1 // pred_region
      %44 = dma.done [#allocation3], 256
    $region13: #{tpu_custom_call.1} parent=1 // pred_fallthru
      _
    // Predicated region
    $region14: #{tpu_custom_call.1} parent=1 // pred_check
      _
    $region15: #{tpu_custom_call.1} parent=1 // pred_check_branch
      %46 = sbr.rel (0) target = $region17
    $region16: #{tpu_custom_call.1} parent=1 // pred_region
      %47 = dma.done [#allocation6], 256
    $region17: #{tpu_custom_call.1} parent=1 // pred_fallthru
      _
    %s48 = sadd.s32 0, 0
    %s49 = smul.u32 2, %s48
    %s50 = sadd.s32 0, 0
    %s51 = smul.u32 2, %s50
    %p52 = scmp.eq.s32.totalorder 0, 0
    // Predicated region
    $region18: #{tpu_custom_call.1} parent=1 // pred_check
      %p53 = pneg %p52
    $region19: #{tpu_custom_call.1} parent=1 // pred_check_branch
      %55 = sbr.rel (%p53) target = $region21
    $region20: #{tpu_custom_call.1} parent=1 // pred_region
      %56 = vst [vmem:[#allocation7] sm:$0xff] 0.0
    $region21: #{tpu_custom_call.1} parent=1 // pred_fallthru
      _
    %v57 = vld [vmem:[#allocation2] sm:$0xff]
    %v58 = vld [vmem:[#allocation2 + $0x8] sm:$0xff]
    %v59 = vld [vmem:[#allocation5] sm:$0xff]
    %v60 = vld [vmem:[#allocation5 + $0x8] sm:$0xff]
    %v61 = vsub.f32 %v57, %v59
    %v62 = vsub.f32 %v58, %v60
    %v63 = vmul.f32 %v61, %v61
    %v64 = vmul.f32 %v62, %v62
    %v65 = vld [vmem:[#allocation7] sm:$0xff]
    %v66 = vadd.f32 %v63, %v64
    %v67 = vadd.f32 %v65, %v66
    %68 = vst [vmem:[#allocation7] sm:$0xff] %v67
    // Predicated region
    $region22: #{tpu_custom_call.1} parent=1 // pred_check
      _
    $region23: #{tpu_custom_call.1} parent=1 // pred_check_branch
      %70 = sbr.rel (0) target = $region25
    $region24: #{tpu_custom_call.1} parent=1 // pred_region
      %s72 = ssub.s32 128, 128
      %73 = vsyncadd [#allocation4], %s72
      %s75 = sshll.u32 [#allocation7], 4
      %s76 = int_to_ptr.vmem [resolvable:$true] %s75
      %78 = dma.vmem_to_hbm [thread:$0]  %s76, 128, %s2, [#allocation4]
    $region25: #{tpu_custom_call.1} parent=1 // pred_fallthru
      _
    // Predicated region
    $region26: #{tpu_custom_call.1} parent=1 // pred_check
      _
    $region27: #{tpu_custom_call.1} parent=1 // pred_check_branch
      %80 = sbr.rel (0) target = $region29
    $region28: #{tpu_custom_call.1} parent=1 // pred_region
      %81 = dma.done [#allocation4], 128
    $region29: #{tpu_custom_call.1} parent=1 // pred_fallthru
      _
    %82 = vsyncpa [#allocation3], 1
    %83 = vsyncpa [#allocation6], 1
    %84 = vsyncpa [#allocation4], 1

</llo_original>
